<compile_context>
chip_gen: v7x
topology: tpu7x:2x2x1
jax: 0.10.0
libtpu: 0.0.40
codegen_flags: <defaults>
</compile_context>

<pallas_src>
import functools

import jax
import jax.numpy as jnp
from jax.experimental import pallas as pl
from jax.experimental.pallas import tpu as pltpu


def _round_up(x, m):
    return ((x + m - 1) // m) * m


def _cmal_kernel(yp_ref, yt_ref, dv_ref, out_ref, acc_ref, *,
                 rows_total, tile_rows, steps_per_core, lane,
                 inv_count, needs_mask):
    c = pl.program_id(0)          # core / partial-sum index ("parallel")
    i = pl.program_id(1)          # streaming step within this core ("arbitrary")

    @pl.when(i == 0)
    def _():
        acc_ref[...] = jnp.zeros_like(acc_ref)

    yp = yp_ref[...].astype(jnp.float32)
    yt = yt_ref[...].astype(jnp.float32)
    dv = dv_ref[...].astype(jnp.float32)

    def accumulate(diff, dvv):
        contrib = diff * pl.reciprocal(dvv, approx=False)
        # Layout-preserving reshape: (tr, lane) -> (tr//8, 8, lane); axis-0
        # sum is a pure-VPU vreg add chain into the tiny (8, lane) scratch.
        acc_ref[...] += contrib.reshape(tile_rows // 8, 8, lane).sum(axis=0)

    if needs_mask:
        # Logical (unclamped) first row of this tile.
        row0 = (c * steps_per_core + i) * tile_rows
        is_boundary = row0 + tile_rows > rows_total

        @pl.when(is_boundary)
        def _():
            # Ragged last block (or fully-duplicated clamped block): mask
            # junk rows.  dv -> 1.0 BEFORE the reciprocal so no Inf/NaN.
            row_ids = row0 + jax.lax.broadcasted_iota(
                jnp.int32, (tile_rows, lane), 0)
            valid = row_ids < rows_total
            dvm = jnp.where(valid, dv, 1.0)
            diff = jnp.where(valid, jnp.abs(yp - yt), 0.0)
            accumulate(diff, dvm)

        @pl.when(jnp.logical_not(is_boundary))
        def _():
            accumulate(jnp.abs(yp - yt), dv)
    else:
        accumulate(jnp.abs(yp - yt), dv)

    @pl.when(i == steps_per_core - 1)
    def _():
        out_ref[...] = (acc_ref[...] * inv_count)[None]


def cmal_normalized_mean_absolute(y_pred, y_true, deviations, *,
                                  tile_rows=4096, lane=128, num_cores=1):
    assert y_pred.shape == y_true.shape == deviations.shape
    assert tile_rows % 8 == 0
    total = y_pred.size
    assert total > 0

    yp = y_pred.reshape(-1)
    yt = y_true.reshape(-1)
    dv = deviations.reshape(-1)

    # Only pad if the element count is not lane aligned (< 128 pad elements).
    # Padded elements contribute |0-0|/1 = 0 to the sum.
    tail = (-total) % lane
    if tail:
        yp = jnp.pad(yp, (0, tail))
        yt = jnp.pad(yt, (0, tail))
        dv = jnp.pad(dv, (0, tail), constant_values=1.0)

    rows = (total + tail) // lane
    yp = yp.reshape(rows, lane)
    yt = yt.reshape(rows, lane)
    dv = dv.reshape(rows, lane)

    tr = min(tile_rows, _round_up(rows, 8))        # don't over-tile tiny inputs
    num_blocks = pl.cdiv(rows, tr)
    cores = max(1, min(num_cores, num_blocks))     # per-core partial sums
    steps = pl.cdiv(num_blocks, cores)

    # Any tile row past `rows` (ragged last block, or duplicated clamped blocks
    # when cores*steps > num_blocks) must be masked out inside the kernel.
    needs_mask = cores * steps * tr > rows

    if cores * steps == num_blocks:
        def in_map(c, i):
            return (c * steps + i, 0)
    else:
        # Clamp so the DMA never indexes past the last valid block; the kernel
        # masks the duplicated rows to zero via their logical row index.
        def in_map(c, i):
            return (jnp.minimum(c * steps + i, num_blocks - 1), 0)

    kernel = functools.partial(
        _cmal_kernel,
        rows_total=rows, tile_rows=tr, steps_per_core=steps, lane=lane,
        inv_count=1.0 / float(total), needs_mask=needs_mask)

    partials = pl.pallas_call(
        kernel,
        out_shape=jax.ShapeDtypeStruct((cores, 8, lane), jnp.float32),
        grid_spec=pltpu.PrefetchScalarGridSpec(
            num_scalar_prefetch=0,
            grid=(cores, steps),
            in_specs=[
                pl.BlockSpec((tr, lane), in_map),
                pl.BlockSpec((tr, lane), in_map),
                pl.BlockSpec((tr, lane), in_map),
            ],
            out_specs=pl.BlockSpec((1, 8, lane), lambda c, i: (c, 0, 0)),
            scratch_shapes=[pltpu.VMEM((8, lane), jnp.float32)],
        ),
        compiler_params=pltpu.CompilerParams(
            dimension_semantics=("parallel", "arbitrary"),
            vmem_limit_bytes=32 * 1024 * 1024,
        ),
    )(yp, yt, dv)

    # Each core's (8, lane) partial sums are already scaled by 1/N; finish
    # with a tiny host-side reduction over cores * 8 * 128 values.
    return jnp.sum(partials)


if __name__ == "__main__":
    key = jax.random.PRNGKey(0)
    k1, k2, k3 = jax.random.split(key, 3)

    # Test 1: NCHW, lane-aligned total (copy-free, unmasked fast path).
    shape = (2, 4, 16, 16)
    y_pred = jax.random.normal(k1, shape, dtype=jnp.float32)
    y_true = jax.random.normal(k2, shape, dtype=jnp.float32)
    deviations = jax.random.uniform(k3, shape, dtype=jnp.float32,
                                    minval=0.5, maxval=2.0)

    result = jax.block_until_ready(
        cmal_normalized_mean_absolute(y_pred, y_true, deviations))
    ref = jnp.mean(jnp.abs(y_pred - y_true) / deviations)
    assert jnp.allclose(result, ref, rtol=1e-4, atol=1e-6), (result, ref)

    # Test 2: row count not a tile multiple -> exercises the gated in-kernel
    # mask and multi-block streaming on a single "core".
    shape2 = (2, 4, 30, 32)   # 7680 elements -> 60 rows of 128 lanes
    yp2 = jax.random.normal(k1, shape2, dtype=jnp.float32)
    yt2 = jax.random.normal(k2, shape2, dtype=jnp.float32)
    dv2 = jax.random.uniform(k3, shape2, dtype=jnp.float32,
                             minval=0.5, maxval=2.0)
    result2 = jax.block_until_ready(
        cmal_normalized_mean_absolute(yp2, yt2, dv2, tile_rows=16))
    ref2 = jnp.mean(jnp.abs(yp2 - yt2) / dv2)
    assert jnp.allclose(result2, ref2, rtol=1e-4, atol=1e-6), (result2, ref2)

    # Test 3: two-partial ("parallel") grid axis with an odd block count ->
    # exercises the clamped duplicate-block DMA path + fully-masked block.
    result3 = jax.block_until_ready(
        cmal_normalized_mean_absolute(yp2, yt2, dv2, tile_rows=24, num_cores=2))
    assert jnp.allclose(result3, ref2, rtol=1e-4, atol=1e-6), (result3, ref2)

    print("KERNEL_OK")
</pallas_src>

<mosaic_0001>
module attributes {stable_mosaic.version = 11 : i64} {
  func.func @_cmal_kernel(%arg0: i32, %arg1: i32, %arg2: memref<16x128xf32, #tpu.memory_space<vmem>>, %arg3: memref<16x128xf32, #tpu.memory_space<vmem>>, %arg4: memref<16x128xf32, #tpu.memory_space<vmem>>, %arg5: memref<1x8x128xf32, #tpu.memory_space<vmem>>, %arg6: memref<8x128xf32, #tpu.memory_space<vmem>>) attributes {dimension_semantics = [#tpu.dimension_semantics<parallel>, #tpu.dimension_semantics<arbitrary>], iteration_bounds = array<i64: 1, 1>, scalar_prefetch = 0 : i64, scratch_operands = 1 : i64, tpu.core_type = #tpu.core_type<tc>, window_params = [{transform_indices = @transform_0, window_bounds = array<i64: 16, 128>}, {transform_indices = @transform_1, window_bounds = array<i64: 16, 128>}, {transform_indices = @transform_2, window_bounds = array<i64: 16, 128>}, {transform_indices = @transform_3, window_bounds = array<i64: 1, 8, 128>}]} {
    %c0_i32 = arith.constant 0 : i32
    %0 = arith.cmpi eq, %arg1, %c0_i32 : i32
    %1 = arith.extui %0 : i1 to i32
    %c0_i32_0 = arith.constant 0 : i32
    %2 = arith.cmpi ne, %1, %c0_i32_0 : i32
    scf.if %2 {
      %cst_12 = arith.constant 0.000000e+00 : f32
      %18 = vector.broadcast %cst_12 : f32 to vector<8x128xf32>
      %c0_13 = arith.constant 0 : index
      %c0_14 = arith.constant 0 : index
      %19 = vector.load %arg6[%c0_13, %c0_14] : memref<8x128xf32, #tpu.memory_space<vmem>>, vector<8x128xf32>
      tpu.vector_store %arg6[%c0_13, %c0_14], %18 {strides = array<i32>} : memref<8x128xf32, #tpu.memory_space<vmem>>, vector<8x128xf32>,
    } else {
    }
    %c0 = arith.constant 0 : index
    %c0_1 = arith.constant 0 : index
    %3 = vector.load %arg2[%c0, %c0_1] : memref<16x128xf32, #tpu.memory_space<vmem>>, vector<16x128xf32>
    %c0_2 = arith.constant 0 : index
    %c0_3 = arith.constant 0 : index
    %4 = vector.load %arg3[%c0_2, %c0_3] : memref<16x128xf32, #tpu.memory_space<vmem>>, vector<16x128xf32>
    %c0_4 = arith.constant 0 : index
    %c0_5 = arith.constant 0 : index
    %5 = vector.load %arg4[%c0_4, %c0_5] : memref<16x128xf32, #tpu.memory_space<vmem>>, vector<16x128xf32>
    %6 = arith.subf %3, %4 : vector<16x128xf32>
    %7 = math.absf %6 : vector<16x128xf32>
    %8 = tpu.reciprocal %5 : vector<16x128xf32> -> vector<16x128xf32>
    %9 = arith.mulf %7, %8 : vector<16x128xf32>
    %c0_6 = arith.constant 0 : index
    %c0_7 = arith.constant 0 : index
    %10 = vector.load %arg6[%c0_6, %c0_7] : memref<8x128xf32, #tpu.memory_space<vmem>>, vector<8x128xf32>
    %11 = vector.shape_cast %9 : vector<16x128xf32> to vector<2x8x128xf32>
    %cst = arith.constant dense<0.000000e+00> : vector<8x128xf32>
    %12 = vector.multi_reduction <add>, %11, %cst [0] : vector<2x8x128xf32> to vector<8x128xf32>
    %13 = arith.addf %10, %12 : vector<8x128xf32>
    %c0_8 = arith.constant 0 : index
    %c0_9 = arith.constant 0 : index
    %14 = vector.load %arg6[%c0_8, %c0_9] : memref<8x128xf32, #tpu.memory_space<vmem>>, vector<8x128xf32>
    tpu.vector_store %arg6[%c0_8, %c0_9], %13 {strides = array<i32>} : memref<8x128xf32, #tpu.memory_space<vmem>>, vector<8x128xf32>,
    %c0_i32_10 = arith.constant 0 : i32
    %15 = arith.cmpi eq, %arg1, %c0_i32_10 : i32
    %16 = arith.extui %15 : i1 to i32
    %c0_i32_11 = arith.constant 0 : i32
    %17 = arith.cmpi ne, %16, %c0_i32_11 : i32
    scf.if %17 {
      %c0_12 = arith.constant 0 : index
      %c0_13 = arith.constant 0 : index
      %18 = vector.load %arg6[%c0_12, %c0_13] : memref<8x128xf32, #tpu.memory_space<vmem>>, vector<8x128xf32>
      %cst_14 = arith.constant 4.8828125E-4 : f32
      %19 = vector.broadcast %cst_14 : f32 to vector<8x128xf32>
      %20 = arith.mulf %18, %19 : vector<8x128xf32>
      %21 = vector.shape_cast %20 : vector<8x128xf32> to vector<1x8x128xf32>
      %c0_15 = arith.constant 0 : index
      %c0_16 = arith.constant 0 : index
      %c0_17 = arith.constant 0 : index
      %22 = vector.load %arg5[%c0_15, %c0_16, %c0_17] : memref<1x8x128xf32, #tpu.memory_space<vmem>>, vector<1x8x128xf32>
      tpu.vector_store %arg5[%c0_15, %c0_16, %c0_17], %21 {strides = array<i32>} : memref<1x8x128xf32, #tpu.memory_space<vmem>>, vector<1x8x128xf32>,
    } else {
    }
    return
  }
  func.func @transform_0(%arg0: i32, %arg1: i32) -> (i32, i32) {
    %c1_i32 = arith.constant 1 : i32
    %0 = arith.muli %arg0, %c1_i32 : i32
    %1 = arith.addi %0, %arg1 : i32
    %c0_i32 = arith.constant 0 : i32
    %c0_i32_0 = arith.constant 0 : i32
    return %1, %c0_i32 : i32, i32
  }
  func.func @transform_1(%arg0: i32, %arg1: i32) -> (i32, i32) {
    %c1_i32 = arith.constant 1 : i32
    %0 = arith.muli %arg0, %c1_i32 : i32
    %1 = arith.addi %0, %arg1 : i32
    %c0_i32 = arith.constant 0 : i32
    %c0_i32_0 = arith.constant 0 : i32
    return %1, %c0_i32 : i32, i32
  }
  func.func @transform_2(%arg0: i32, %arg1: i32) -> (i32, i32) {
    %c1_i32 = arith.constant 1 : i32
    %0 = arith.muli %arg0, %c1_i32 : i32
    %1 = arith.addi %0, %arg1 : i32
    %c0_i32 = arith.constant 0 : i32
    %c0_i32_0 = arith.constant 0 : i32
    return %1, %c0_i32 : i32, i32
  }
  func.func @transform_3(%arg0: i32, %arg1: i32) -> (i32, i32, i32) {
    %c0_i32 = arith.constant 0 : i32
    %c0_i32_0 = arith.constant 0 : i32
    %c0_i32_1 = arith.constant 0 : i32
    return %arg0, %c0_i32, %c0_i32_0 : i32, i32, i32
  }
}

</mosaic_0001>

<llo_original>
// kernel: tpu_custom_call.1
$region0: #{tpu_custom_call.1}
  #allocation0 [shape = 'u32[]', space=smem, size = 0x4, offset = 0x4, fixed_abs, tag = 'smem constant byte address 0x4 - core index']
  #allocation1 [shape = 'u32[144,128]{1,0:T(1,128)}', space=vmem, size = 0x12000, scoped, tag = 'internal scratch']
  #allocation2 [shape = 'f32[8,128]{1,0:T(8,128)}', space=vmem, size = 0x1000, scoped, tag = 'scratch operand']
  %s0 = inlined_call_operand.hbm [shape: f32[16,128], index: 0, kind: input, shape index: {}]
  %s1 = inlined_call_operand.hbm [shape: f32[16,128], index: 1, kind: input, shape index: {}]
  %s2 = inlined_call_operand.hbm [shape: f32[16,128], index: 2, kind: input, shape index: {}]
  %s3 = inlined_call_operand.hbm [shape: f32[1,8,128], index: 3, kind: output, shape index: {}]
  %s4 = sld [smem:[#allocation0]]
  $region42: #{tpu_custom_call.1} parent=0
    _
  %s6 = ssub.s32 1, %s4
  %s7 = scalar_select 0, %s6, %s4
  $region1: #{tpu_custom_call.1} parent=0
    #allocation3 [shape = 'u8[8192]{0}', space=vmem, size = 0x2000, scoped, tag = 'input window, operand 0, single buffered']
    #allocation4 [shape = 's32[1]{0}', space=sflag, size = 0x4, scoped, tag = 'scoped memory for tpu_custom_call.1']
    #allocation5 [shape = 's32[1]{0}', space=sflag, size = 0x4, scoped, tag = 'scoped memory for tpu_custom_call.1']
    #allocation6 [shape = 'u8[8192]{0}', space=vmem, size = 0x2000, scoped, tag = 'input window, operand 1, single buffered']
    #allocation7 [shape = 's32[1]{0}', space=sflag, size = 0x4, scoped, tag = 'scoped memory for tpu_custom_call.1']
    #allocation8 [shape = 'u8[8192]{0}', space=vmem, size = 0x2000, scoped, tag = 'input window, operand 2, single buffered']
    #allocation9 [shape = 'u8[4096]{0}', space=vmem, size = 0x1000, scoped, tag = 'output window, operand 0, single buffered']
    %8 = vsyncpa [#allocation4], 0
    %9 = vsyncpa [#allocation7], 0
    %10 = vsyncpa [#allocation5], 0
    // Predicated region
    $region2: #{tpu_custom_call.1} parent=1 // pred_check
      _
    $region3: #{tpu_custom_call.1} parent=1 // pred_check_branch
      %12 = sbr.rel (0) target = $region5
    $region4: #{tpu_custom_call.1} parent=1 // pred_region
      %s13 = sadd.s32 0, 0
      %s14 = smul.u32 2, %s13
      %s16 = ssub.s32 256, 256
      %17 = vsyncadd [#allocation4], %s16
      %s18 = smul.addr %s14, 128
      %s19 = scalar_lea.hbm %s0, %s18
      %s20 = sshll.u32 [#allocation3], 4
      %s21 = int_to_ptr.vmem [resolvable:$true] %s20
      %26 = dma.hbm_to_vmem [thread:$0]  %s19, 256, %s21, [#allocation4], 128, 128, 8
    $region5: #{tpu_custom_call.1} parent=1 // pred_fallthru
      _
    // Predicated region
    $region6: #{tpu_custom_call.1} parent=1 // pred_check
      _
    $region7: #{tpu_custom_call.1} parent=1 // pred_check_branch
      %28 = sbr.rel (0) target = $region9
    $region8: #{tpu_custom_call.1} parent=1 // pred_region
      %s29 = sadd.s32 0, 0
      %s30 = smul.u32 2, %s29
      %s32 = ssub.s32 256, 256
      %33 = vsyncadd [#allocation7], %s32
      %s34 = smul.addr %s30, 128
      %s35 = scalar_lea.hbm %s1, %s34
      %s36 = sshll.u32 [#allocation6], 4
      %s37 = int_to_ptr.vmem [resolvable:$true] %s36
      %42 = dma.hbm_to_vmem [thread:$0]  %s35, 256, %s37, [#allocation7], 128, 128, 8
    $region9: #{tpu_custom_call.1} parent=1 // pred_fallthru
      _
    // Predicated region
    $region10: #{tpu_custom_call.1} parent=1 // pred_check
      _
    $region11: #{tpu_custom_call.1} parent=1 // pred_check_branch
      %44 = sbr.rel (0) target = $region13
    $region12: #{tpu_custom_call.1} parent=1 // pred_region
      %s45 = sadd.s32 0, 0
      %s46 = smul.u32 2, %s45
      %s48 = ssub.s32 256, 256
      %49 = vsyncadd [#allocation7], %s48
      %s50 = smul.addr %s46, 128
      %s51 = scalar_lea.hbm %s2, %s50
      %s52 = sshll.u32 [#allocation8], 4
      %s53 = int_to_ptr.vmem [resolvable:$true] %s52
      %58 = dma.hbm_to_vmem [thread:$0]  %s51, 256, %s53, [#allocation7], 128, 128, 8
    $region13: #{tpu_custom_call.1} parent=1 // pred_fallthru
      _
    // Predicated region
    $region14: #{tpu_custom_call.1} parent=1 // pred_check
      _
    $region15: #{tpu_custom_call.1} parent=1 // pred_check_branch
      %60 = sbr.rel (0) target = $region17
    $region16: #{tpu_custom_call.1} parent=1 // pred_region
      %61 = dma.done [#allocation4], 256
    $region17: #{tpu_custom_call.1} parent=1 // pred_fallthru
      _
    // Predicated region
    $region18: #{tpu_custom_call.1} parent=1 // pred_check
      _
    $region19: #{tpu_custom_call.1} parent=1 // pred_check_branch
      %63 = sbr.rel (0) target = $region21
    $region20: #{tpu_custom_call.1} parent=1 // pred_region
      %64 = dma.done [#allocation7], 256
    $region21: #{tpu_custom_call.1} parent=1 // pred_fallthru
      _
    // Predicated region
    $region22: #{tpu_custom_call.1} parent=1 // pred_check
      _
    $region23: #{tpu_custom_call.1} parent=1 // pred_check_branch
      %66 = sbr.rel (0) target = $region25
    $region24: #{tpu_custom_call.1} parent=1 // pred_region
      %67 = dma.done [#allocation7], 256
    $region25: #{tpu_custom_call.1} parent=1 // pred_fallthru
      _
    %s68 = sadd.s32 0, 0
    %s69 = smul.u32 2, %s68
    %s70 = sadd.s32 0, 0
    %s71 = smul.u32 2, %s70
    %s72 = sadd.s32 0, 0
    %s73 = smul.u32 2, %s72
    %p74 = scmp.eq.s32.totalorder 0, 0
    // Predicated region
    $region26: #{tpu_custom_call.1} parent=1 // pred_check
      %p75 = pneg %p74
    $region27: #{tpu_custom_call.1} parent=1 // pred_check_branch
      %77 = sbr.rel (%p75) target = $region29
    $region28: #{tpu_custom_call.1} parent=1 // pred_region
      %78 = vst [vmem:[#allocation2] sm:$0xff] 0.0
    $region29: #{tpu_custom_call.1} parent=1 // pred_fallthru
      _
    %v79 = vld [vmem:[#allocation3] sm:$0xff]
    %v80 = vld [vmem:[#allocation3 + $0x8] sm:$0xff]
    %v81 = vld [vmem:[#allocation6] sm:$0xff]
    %v82 = vld [vmem:[#allocation6 + $0x8] sm:$0xff]
    %v83 = vld [vmem:[#allocation8] sm:$0xff]
    %v84 = vld [vmem:[#allocation8 + $0x8] sm:$0xff]
    %v85 = vsub.f32 %v79, %v81
    %v86 = vsub.f32 %v80, %v82
    %v87 = vand.u32 2147483647, %v85
    %v88 = vand.u32 2147483647, %v86
    %v89 = vrcp.pop %v83
    %v90 = vrcp.pop %v84
    %v91 = vmul.f32 %v87, %v89
    %v92 = vmul.f32 %v88, %v90
    %v93 = vld [vmem:[#allocation2] sm:$0xff]
    %v94 = vadd.f32 %v91, %v92
    %v95 = vadd.f32 %v93, %v94
    %96 = vst [vmem:[#allocation2] sm:$0xff] %v95
    // Predicated region
    $region30: #{tpu_custom_call.1} parent=1 // pred_check
      %p97 = pneg %p74
    $region31: #{tpu_custom_call.1} parent=1 // pred_check_branch
      %99 = sbr.rel (%p97) target = $region33
    $region32: #{tpu_custom_call.1} parent=1 // pred_region
      %v100 = vld [vmem:[#allocation2] sm:$0xff]
      %v101 = vmul.f32 %v100, 0.00048828125
      %102 = vst [vmem:[#allocation9] sm:$0xff] %v101
    $region33: #{tpu_custom_call.1} parent=1 // pred_fallthru
      _
    // Predicated region
    $region34: #{tpu_custom_call.1} parent=1 // pred_check
      _
    $region35: #{tpu_custom_call.1} parent=1 // pred_check_branch
      %104 = sbr.rel (0) target = $region37
    $region36: #{tpu_custom_call.1} parent=1 // pred_region
      %s106 = ssub.s32 128, 128
      %107 = vsyncadd [#allocation5], %s106
      %s109 = sshll.u32 [#allocation9], 4
      %s110 = int_to_ptr.vmem [resolvable:$true] %s109
      %112 = dma.vmem_to_hbm [thread:$0]  %s110, 128, %s3, [#allocation5]
    $region37: #{tpu_custom_call.1} parent=1 // pred_fallthru
      _
    // Predicated region
    $region38: #{tpu_custom_call.1} parent=1 // pred_check
      _
    $region39: #{tpu_custom_call.1} parent=1 // pred_check_branch
      %114 = sbr.rel (0) target = $region41
    $region40: #{tpu_custom_call.1} parent=1 // pred_region
      %115 = dma.done [#allocation5], 128
    $region41: #{tpu_custom_call.1} parent=1 // pred_fallthru
      _
    %116 = vsyncpa [#allocation4], 1
    %117 = vsyncpa [#allocation7], 1
    %118 = vsyncpa [#allocation5], 1

</llo_original>
